<compile_context>
chip_gen: v7x
topology: tpu7x:2x2x1
jax: 0.10.0
libtpu: 0.0.40
codegen_flags: <defaults>
</compile_context>

<pallas_src>
import functools

import jax
import jax.numpy as jnp
from jax.experimental import pallas as pl
from jax.experimental.pallas import tpu as pltpu

EPS = 1e-6
_MIN_PALLAS_BYTES = 512 * 1024  # below this a standalone pallas_call is pure overhead


def _layernorm_kernel(alpha_ref, beta_ref, x_ref, o_ref, *, eps):
    """One grid step normalizes a (TM, D) tile of rows with torch unbiased-std semantics."""
    xf = x_ref[...].astype(jnp.float32)                          # (TM, D)
    d = xf.shape[-1]

    mean = jnp.mean(xf, axis=-1, keepdims=True)                  # (TM, 1)
    diff = xf - mean
    # torch.std default is unbiased: /(D-1).  Guard the degenerate D==1 case against /0.
    var = jnp.sum(diff * diff, axis=-1, keepdims=True) * (1.0 / max(d - 1, 1))
    std = jnp.sqrt(var)
    scale = alpha_ref[0] / (std + eps)                           # (TM, 1), alpha folded in

    # Re-read the VMEM-resident tile for the output pass instead of holding the full
    # (TM, D) centered intermediate live across the std/scale chain (avoids vreg spills
    # at large tiles; numerically identical to reusing `diff`).
    o_ref[...] = ((x_ref[...].astype(jnp.float32) - mean) * scale
                  + beta_ref[0]).astype(o_ref.dtype)


def _vmem_capacity_bytes():
    try:
        return int(pltpu.get_tpu_info().vmem_capacity_bytes)
    except Exception:
        return 64 * 1024 * 1024  # conservative (v7x-sized) fallback


def _plan_tiles(rows, d, in_itemsize, out_itemsize):
    """Byte-budget-aware row-tile and VMEM-limit selection per TPU generation."""
    vmem_cap = _vmem_capacity_bytes()
    if vmem_cap <= 64 * 1024 * 1024:        # v7x-class: 64 MiB VMEM per TensorCore
        tile_budget = 40 * 1024 * 1024
        vmem_ceiling = 48 * 1024 * 1024
    else:                                   # v5e / v6e: 128 MiB VMEM
        tile_budget = 90 * 1024 * 1024
        vmem_ceiling = 100 * 1024 * 1024

    # Sublane-packing-aligned row step: 8 (f32), 16 (bf16), 32 (int8/fp8).
    row_align = max(8, 32 // in_itemsize)

    # Per-row VMEM bytes: double-buffered input + double-buffered output + ~1x f32 live.
    bytes_per_row = d * (2 * in_itemsize + 2 * out_itemsize + 4)
    tm = tile_budget // max(bytes_per_row, 1)
    tm = min(tm, 512, rows)
    tm = max(row_align, (tm // row_align) * row_align)

    # Guarantee >= 2 grid steps so the "parallel" row axis can actually shard across
    # both TensorCores on v7x (and keep the DMA pipeline non-trivially occupied).
    if rows > row_align and pl.cdiv(rows, tm) < 2:
        tm = max(row_align, ((rows // 2) // row_align) * row_align)

    per_step = tm * d * (2 * in_itemsize + 2 * out_itemsize + 4)
    vmem_limit = int(min(vmem_ceiling,
                         max(16 * 1024 * 1024, per_step + per_step // 4 + 2 * 1024 * 1024)))
    return tm, vmem_limit


def _layer_norm_jax(x, alpha, beta, eps=EPS):
    """Pure-JAX fallback / reference (same unbiased-std semantics as the kernel)."""
    mean = jnp.mean(x, axis=-1, keepdims=True)
    xc = x - mean
    var = jnp.sum(xc * xc, axis=-1, keepdims=True) / max(x.shape[-1] - 1, 1)
    std = jnp.sqrt(var)
    return alpha[0] * xc / (std + eps) + beta[0]


def layer_norm(x, alpha, beta, *, eps=EPS, force_pallas=False):
    """Fused LayerNormalization over the last dim of x (any leading dims)."""
    orig_shape = x.shape
    D = orig_shape[-1]
    R = 1
    for s in orig_shape[:-1]:
        R *= s

    in_itemsize = jnp.dtype(x.dtype).itemsize
    out_itemsize = in_itemsize

    # Tiny decode-shaped tensors: pallas_call launch + per-step overhead exceeds the whole
    # LN cost, and XLA fuses the plain formula into adjacent elementwise ops for free.
    if not force_pallas and R * D * in_itemsize < _MIN_PALLAS_BYTES:
        return _layer_norm_jax(x, alpha, beta, eps)

    x2 = x.reshape(R, D)
    tm, vmem_limit = _plan_tiles(R, D, in_itemsize, out_itemsize)
    grid = (pl.cdiv(R, tm),)  # non-dividing tail block handled by masked OOB reads/writes

    kernel = functools.partial(_layernorm_kernel, eps=eps)

    cost = pl.CostEstimate(
        flops=7 * R * D,                                   # sub/mul/sum/sub/mul/add (rough)
        transcendentals=2 * R,                             # sqrt + divide per row
        bytes_accessed=R * D * (in_itemsize + out_itemsize) + 16,
    )

    out = pl.pallas_call(
        kernel,
        out_shape=jax.ShapeDtypeStruct((R, D), x.dtype),
        grid_spec=pltpu.PrefetchScalarGridSpec(
            num_scalar_prefetch=0,
            grid=grid,
            in_specs=[
                pl.BlockSpec(memory_space=pltpu.MemorySpace.SMEM),   # alpha (1,)
                pl.BlockSpec(memory_space=pltpu.MemorySpace.SMEM),   # beta  (1,)
                pl.BlockSpec((tm, D), lambda i: (i, 0)),             # x row tile (lane-dense)
            ],
            out_specs=pl.BlockSpec((tm, D), lambda i: (i, 0)),
        ),
        compiler_params=pltpu.CompilerParams(
            dimension_semantics=("parallel",),   # rows independent -> shard over 2 TCs on v7x
            vmem_limit_bytes=vmem_limit,
        ),
        cost_estimate=cost,
    )(alpha, beta, x2)

    return out.reshape(orig_shape)


def decoder_forward(x, encoder_output, src_mask, tgt_mask, layers, alpha, beta,
                    *, eps=EPS, force_pallas=False):
    """Decoder.forward: apply the (external) layer stack, then the fused LayerNorm kernel."""
    # TODO(synk): the decoder layers are an externally supplied nn.ModuleList of opaque
    # DecoderBlocks; they are applied here as user-provided JAX callables, not as Pallas code.
    for layer in layers:
        x = layer(x, encoder_output, src_mask, tgt_mask)
    return layer_norm(x, alpha, beta, eps=eps, force_pallas=force_pallas)


if __name__ == "__main__":
    key = jax.random.PRNGKey(0)
    kx, ke, k1, k2 = jax.random.split(key, 4)

    B, S, D = 2, 8, 128
    x = jax.random.normal(kx, (B, S, D), dtype=jnp.float32)
    encoder_output = jax.random.normal(ke, (B, S, D), dtype=jnp.float32)
    src_mask = jnp.ones((B, 1, 1, S), dtype=jnp.float32)
    tgt_mask = jnp.tril(jnp.ones((S, S), dtype=jnp.float32))[None, None]

    # Example decoder "layers": deterministic callables with the DecoderBlock call signature.
    shift1 = jax.random.normal(k1, (D,), dtype=jnp.float32) * 0.02
    shift2 = jax.random.normal(k2, (D,), dtype=jnp.float32) * 0.02
    layers = (
        lambda h, eo, sm, tgm: h + 0.1 * jnp.tanh(eo) + shift1,
        lambda h, eo, sm, tgm: h + 0.05 * jnp.tanh(h) + shift2,
    )

    # LayerNormalization params (module init is ones(1)/zeros(1); perturbed to exercise affine)
    alpha = jnp.full((1,), 1.25, dtype=jnp.float32)
    beta = jnp.full((1,), 0.10, dtype=jnp.float32)

    # force_pallas=True so the demo exercises the Pallas kernel even at this tiny shape
    # (the auto-dispatcher would otherwise use the fused-by-XLA fallback here).
    out = decoder_forward(x, encoder_output, src_mask, tgt_mask, layers, alpha, beta,
                          force_pallas=True)
    jax.block_until_ready(out)
    assert out.shape == (B, S, D)

    # Correctness vs pure-JAX reference (same layers + same unbiased-std LayerNorm formula).
    h = x
    for layer in layers:
        h = layer(h, encoder_output, src_mask, tgt_mask)
    ref = _layer_norm_jax(h, alpha, beta)
    assert jnp.allclose(out, ref, atol=1e-4, rtol=1e-4), "mismatch vs reference"

    print("KERNEL_OK")
</pallas_src>

<mosaic_0001>
module attributes {stable_mosaic.version = 11 : i64} {
  func.func @_layernorm_kernel(%arg0: i32, %arg1: memref<1xf32, #tpu.memory_space<smem>>, %arg2: memref<1xf32, #tpu.memory_space<smem>>, %arg3: memref<8x128xf32, #tpu.memory_space<vmem>>, %arg4: memref<8x128xf32, #tpu.memory_space<vmem>>) attributes {dimension_semantics = [#tpu.dimension_semantics<parallel>], iteration_bounds = array<i64: 2>, scalar_prefetch = 0 : i64, scratch_operands = 0 : i64, tpu.core_type = #tpu.core_type<tc>, window_params = [{transform_indices = @transform_0, window_bounds = array<i64: 1>}, {transform_indices = @transform_1, window_bounds = array<i64: 1>}, {transform_indices = @transform_2, window_bounds = array<i64: 8, 128>}, {transform_indices = @transform_3, window_bounds = array<i64: 8, 128>}]} {
    %c0 = arith.constant 0 : index
    %c0_0 = arith.constant 0 : index
    %0 = vector.load %arg3[%c0, %c0_0] : memref<8x128xf32, #tpu.memory_space<vmem>>, vector<8x128xf32>
    %cst = arith.constant dense<0.000000e+00> : vector<8xf32>
    %1 = vector.multi_reduction <add>, %0, %cst [1] : vector<8x128xf32> to vector<8xf32>
    %2 = vector.shape_cast %1 : vector<8xf32> to vector<8x1xf32>
    %cst_1 = arith.constant 1.280000e+02 : f32
    %3 = vector.broadcast %cst_1 : f32 to vector<8x1xf32>
    %4 = arith.divf %2, %3 : vector<8x1xf32>
    %5 = vector.broadcast %4 : vector<8x1xf32> to vector<8x128xf32>
    %6 = arith.subf %0, %5 : vector<8x128xf32>
    %7 = arith.mulf %6, %6 : vector<8x128xf32>
    %cst_2 = arith.constant dense<0.000000e+00> : vector<8xf32>
    %8 = vector.multi_reduction <add>, %7, %cst_2 [1] : vector<8x128xf32> to vector<8xf32>
    %9 = vector.shape_cast %8 : vector<8xf32> to vector<8x1xf32>
    %cst_3 = arith.constant 0.00787401571 : f32
    %10 = vector.broadcast %cst_3 : f32 to vector<8x1xf32>
    %11 = arith.mulf %9, %10 : vector<8x1xf32>
    %12 = math.sqrt %11 : vector<8x1xf32>
    %c0_4 = arith.constant 0 : index
    %13 = memref.load %arg1[%c0_4] : memref<1xf32, #tpu.memory_space<smem>>
    %cst_5 = arith.constant 9.99999997E-7 : f32
    %14 = vector.broadcast %cst_5 : f32 to vector<8x1xf32>
    %15 = arith.addf %12, %14 : vector<8x1xf32>
    %16 = vector.broadcast %13 : f32 to vector<8x1xf32>
    %17 = arith.divf %16, %15 : vector<8x1xf32>
    %c0_6 = arith.constant 0 : index
    %c0_7 = arith.constant 0 : index
    %18 = vector.load %arg3[%c0_6, %c0_7] : memref<8x128xf32, #tpu.memory_space<vmem>>, vector<8x128xf32>
    %19 = vector.broadcast %4 : vector<8x1xf32> to vector<8x128xf32>
    %20 = arith.subf %18, %19 : vector<8x128xf32>
    %21 = vector.broadcast %17 : vector<8x1xf32> to vector<8x128xf32>
    %22 = arith.mulf %20, %21 : vector<8x128xf32>
    %c0_8 = arith.constant 0 : index
    %23 = memref.load %arg2[%c0_8] : memref<1xf32, #tpu.memory_space<smem>>
    %24 = vector.broadcast %23 : f32 to vector<8x128xf32>
    %25 = arith.addf %22, %24 : vector<8x128xf32>
    %c0_9 = arith.constant 0 : index
    %c0_10 = arith.constant 0 : index
    %26 = vector.load %arg4[%c0_9, %c0_10] : memref<8x128xf32, #tpu.memory_space<vmem>>, vector<8x128xf32>
    tpu.vector_store %arg4[%c0_9, %c0_10], %25 {strides = array<i32>} : memref<8x128xf32, #tpu.memory_space<vmem>>, vector<8x128xf32>,
    return
  }
  func.func @transform_0(%arg0: i32) -> i32 {
    %c0_i32 = arith.constant 0 : i32
    %c0_i32_0 = arith.constant 0 : i32
    return %c0_i32 : i32
  }
  func.func @transform_1(%arg0: i32) -> i32 {
    %c0_i32 = arith.constant 0 : i32
    %c0_i32_0 = arith.constant 0 : i32
    return %c0_i32 : i32
  }
  func.func @transform_2(%arg0: i32) -> (i32, i32) {
    %c0_i32 = arith.constant 0 : i32
    %c0_i32_0 = arith.constant 0 : i32
    return %arg0, %c0_i32 : i32, i32
  }
  func.func @transform_3(%arg0: i32) -> (i32, i32) {
    %c0_i32 = arith.constant 0 : i32
    %c0_i32_0 = arith.constant 0 : i32
    return %arg0, %c0_i32 : i32, i32
  }
}

</mosaic_0001>

<llo_original>
// kernel: tpu_custom_call.1
$region0: #{tpu_custom_call.1}
  #allocation0 [shape = 'u32[]', space=smem, size = 0x4, offset = 0x4, fixed_abs, tag = 'smem constant byte address 0x4 - core index']
  #allocation1 [shape = 'u32[144,128]{1,0:T(1,128)}', space=vmem, size = 0x12000, scoped, tag = 'internal scratch']
  #allocation2 [shape = 'f32[1]{0:T(128)S(6)}', space=smem, size = 0x200, scoped, tag = 'scoped memory for tpu_custom_call.1']
  #allocation3 [shape = 'f32[1]{0:T(128)S(6)}', space=smem, size = 0x200, scoped, tag = 'scoped memory for tpu_custom_call.1']
  %s0 = inlined_call_operand.<no memory space> [shape: f32[1], index: 0, kind: input, shape index: {}]
  %s1 = inlined_call_operand.<no memory space> [shape: f32[1], index: 1, kind: input, shape index: {}]
  %s2 = inlined_call_operand.hbm [shape: f32[16,128], index: 2, kind: input, shape index: {}]
  %s3 = inlined_call_operand.hbm [shape: f32[16,128], index: 3, kind: output, shape index: {}]
  %s4 = sld [smem:[#allocation0]]
  $region49: #{tpu_custom_call.1} parent=0
    _
  %s6 = ssub.s32 1, %s4
  %s7 = scalar_select 0, %s6, %s4
  %8 = sst [smem:[#allocation2]] %s0
  %9 = sst [smem:[#allocation3]] %s1
  $region1: #{tpu_custom_call.1} parent=0
    #allocation4 [shape = 'u8[8192]{0}', space=vmem, size = 0x2000, scoped, tag = 'input window, operand 2']
    #allocation5 [shape = 's32[2]{0}', space=sflag, size = 0x8, scoped, tag = 'scoped memory for tpu_custom_call.1']
    #allocation6 [shape = 's32[2]{0}', space=sflag, size = 0x8, scoped, tag = 'scoped memory for tpu_custom_call.1']
    #allocation7 [shape = 'u8[8192]{0}', space=vmem, size = 0x2000, scoped, tag = 'output window, operand 0']
    %10 = vsyncpa [#allocation5], 0
    %s11 = scalar_lea.sflag [#allocation5], 1
    %12 = vsyncpa %s11, 0
    %13 = vsyncpa [#allocation6], 0
    %s14 = scalar_lea.sflag [#allocation6], 1
    %15 = vsyncpa %s14, 0
    loop: start=0, step=1, limit=4
    $region2: #{tpu_custom_call.1} parent=1 // loop_pre_header
      _
    $region3: #{tpu_custom_call.1} parent=1 // loop_header
      %s17 = sphi 0, %s21
      %p18 = scmp.ge.s32.totalorder %s17, 4
      %s25 = sphi 0, %s25
      %s27 = sphi 0, %s25
      %s28 = sphi 0, %s27
      %s42 = sphi 0, %s28
      %s46 = sphi 0, %s46
      %s48 = sphi 0, %s46
      %s49 = sphi 0, %s48
      %s63 = sphi 0, %s49
      %s69 = sphi 0, %s71
      %s72 = sphi 0, %s69
      %s73 = sphi 0, %s72
      %s89 = sphi 0, %s73
      %s95 = sphi 0, %s97
      %s98 = sphi 0, %s95
      %s99 = sphi 0, %s98
      %s115 = sphi 0, %s99
    $region4: #{tpu_custom_call.1} parent=1 // loop_header_branch
      %20 = sbr.rel (%p18) target = $region8
    $region5: #{tpu_custom_call.1} parent=1 // loop_body
      %s22 = ssub.s32 %s17, 1
      %s23 = ssub.s32 %s17, 2
      %s24 = sadd.s32 %s17, 1
      %s26 = sadd.s32 %s25, 1
      %p29 = scmp.eq.s32.totalorder %s17, 1
      %p30 = scmp.ne.s32.totalorder %s25, %s27
      %p31 = scmp.eq.s32.totalorder %s17, 0
      %p32 = por %p30, %p31
      %p33 = scmp.ne.s32.totalorder %s25, %s27
      %p34 = scmp.eq.s32.totalorder %s22, 1
      %p35 = por %p33, %p34
      %p36 = scmp.ne.s32.totalorder %s27, %s28
      %p37 = scmp.eq.s32.totalorder %s22, 0
      %p38 = por %p36, %p37
      %p39 = scmp.ne.s32.totalorder %s27, %s28
      %p40 = scmp.eq.s32.totalorder %s23, 1
      %p41 = por %p39, %p40
      %p43 = scmp.ne.s32.totalorder %s28, %s42
      %p44 = scmp.eq.s32.totalorder %s23, 0
      %p45 = por %p43, %p44
      %s47 = sadd.s32 %s46, 1
      %p50 = scmp.eq.s32.totalorder %s17, 1
      %p51 = scmp.ne.s32.totalorder %s46, %s48
      %p52 = scmp.eq.s32.totalorder %s17, 0
      %p53 = por %p51, %p52
      %p54 = scmp.ne.s32.totalorder %s46, %s48
      %p55 = scmp.eq.s32.totalorder %s22, 1
      %p56 = por %p54, %p55
      %p57 = scmp.ne.s32.totalorder %s48, %s49
      %p58 = scmp.eq.s32.totalorder %s22, 0
      %p59 = por %p57, %p58
      %p60 = scmp.ne.s32.totalorder %s48, %s49
      %p61 = scmp.eq.s32.totalorder %s23, 1
      %p62 = por %p60, %p61
      %p64 = scmp.ne.s32.totalorder %s49, %s63
      %p65 = scmp.eq.s32.totalorder %s23, 0
      %p66 = por %p64, %p65
      %s67 = ssub.s32 %s17, %s24
      %p68 = scmp.eq.s32.totalorder %s67, 0
      %s70 = sadd.s32 %s69, 1
      %s71 = scalar_select %p68, %s69, %s70
      %p74 = pneg %p68
      %p75 = scmp.eq.s32.totalorder %s17, 1
      %p76 = por %p74, %p75
      %p77 = scmp.ne.s32.totalorder %s69, %s72
      %p78 = scmp.eq.s32.totalorder %s17, 0
      %p79 = por %p77, %p78
      %p80 = scmp.ne.s32.totalorder %s69, %s72
      %p81 = scmp.eq.s32.totalorder %s22, 1
      %p82 = por %p80, %p81
      %p83 = scmp.ne.s32.totalorder %s72, %s73
      %p84 = scmp.eq.s32.totalorder %s22, 0
      %p85 = por %p83, %p84
      %p86 = scmp.ne.s32.totalorder %s72, %s73
      %p87 = scmp.eq.s32.totalorder %s23, 1
      %p88 = por %p86, %p87
      %p90 = scmp.ne.s32.totalorder %s73, %s89
      %p91 = scmp.eq.s32.totalorder %s23, 0
      %p92 = por %p90, %p91
      %s93 = ssub.s32 %s17, %s24
      %p94 = scmp.eq.s32.totalorder %s93, 0
      %s96 = sadd.s32 %s95, 1
      %s97 = scalar_select %p94, %s95, %s96
      %p100 = pneg %p94
      %p101 = scmp.eq.s32.totalorder %s17, 1
      %p102 = por %p100, %p101
      %p103 = scmp.ne.s32.totalorder %s95, %s98
      %p104 = scmp.eq.s32.totalorder %s17, 0
      %p105 = por %p103, %p104
      %p106 = scmp.ne.s32.totalorder %s95, %s98
      %p107 = scmp.eq.s32.totalorder %s22, 1
      %p108 = por %p106, %p107
      %p109 = scmp.ne.s32.totalorder %s98, %s99
      %p110 = scmp.eq.s32.totalorder %s22, 0
      %p111 = por %p109, %p110
      %p112 = scmp.ne.s32.totalorder %s98, %s99
      %p113 = scmp.eq.s32.totalorder %s23, 1
      %p114 = por %p112, %p113
      %p116 = scmp.ne.s32.totalorder %s99, %s115
      %p117 = scmp.eq.s32.totalorder %s23, 0
      %p118 = por %p116, %p117
      %p119 = scmp.le.s32.totalorder 1, %s17
      %p120 = scmp.lt.s32.totalorder %s17, 3
      %p121 = pnand %p119, %p120
      %p122 = pneg %p121
      // Predicated region
      $region9: #{tpu_custom_call.1} parent=5 // pred_check
        _
      $region10: #{tpu_custom_call.1} parent=5 // pred_check_branch
        %124 = sbr.rel (%p121) target = $region12
      $region11: #{tpu_custom_call.1} parent=5 // pred_region
        %s125 = ssub.s32 %s17, 1
        // Predicated region
        $region13: #{tpu_custom_call.1} parent=11 // pred_check
          %p126 = pneg %p38
        $region14: #{tpu_custom_call.1} parent=11 // pred_check_branch
          %128 = sbr.rel (%p126) target = $region16
        $region15: #{tpu_custom_call.1} parent=11 // pred_region
          _
        $region16: #{tpu_custom_call.1} parent=11 // pred_fallthru
          _
        // Predicated region
        $region17: #{tpu_custom_call.1} parent=11 // pred_check
          %p129 = pneg %p59
        $region18: #{tpu_custom_call.1} parent=11 // pred_check_branch
          %131 = sbr.rel (%p129) target = $region20
        $region19: #{tpu_custom_call.1} parent=11 // pred_region
          _
        $region20: #{tpu_custom_call.1} parent=11 // pred_fallthru
          _
      $region12: #{tpu_custom_call.1} parent=5 // pred_fallthru
        _
      %p132 = scmp.lt.s32.totalorder %s17, 2
      // Predicated region
      $region21: #{tpu_custom_call.1} parent=5 // pred_check
        %p133 = pneg %p132
      $region22: #{tpu_custom_call.1} parent=5 // pred_check_branch
        %135 = sbr.rel (%p133) target = $region24
      $region23: #{tpu_custom_call.1} parent=5 // pred_region
        // Predicated region
        $region25: #{tpu_custom_call.1} parent=23 // pred_check
          %p136 = pneg %p79
        $region26: #{tpu_custom_call.1} parent=23 // pred_check_branch
          %138 = sbr.rel (%p136) target = $region28
        $region27: #{tpu_custom_call.1} parent=23 // pred_region
          %s139 = sand.u32 %s69, 1
          %s140 = scalar_lea.sflag [#allocation5], %s139
          %s141 = sand.u32 %s69, 1
          %s142 = smul.addr %s141, 8
          %s143 = scalar_lea.vmem [#allocation4], %s142
          %s145 = ssub.s32 128, 128
          %146 = vsyncadd %s140, %s145
          %s147 = smul.addr %s17, 128
          %s148 = scalar_lea.hbm %s2, %s147
          %s150 = sshll.u32 %s143, 4
          %s151 = int_to_ptr.vmem [resolvable:$true] %s150
          %153 = dma.hbm_to_vmem [thread:$0]  %s148, 128, %s151, %s140
        $region28: #{tpu_custom_call.1} parent=23 // pred_fallthru
          _
      $region24: #{tpu_custom_call.1} parent=5 // pred_fallthru
        _
      %p154 = scmp.le.s32.totalorder 1, %s17
      %p155 = scmp.lt.s32.totalorder %s17, 3
      %p156 = pnand %p154, %p155
      %p157 = pneg %p156
      // Predicated region
      $region29: #{tpu_custom_call.1} parent=5 // pred_check
        _
      $region30: #{tpu_custom_call.1} parent=5 // pred_check_branch
        %159 = sbr.rel (%p156) target = $region32
      $region31: #{tpu_custom_call.1} parent=5 // pred_region
        %s160 = ssub.s32 %s17, 1
        %s161 = sand.u32 %s72, 1
        %s162 = scalar_lea.sflag [#allocation5], %s161
        %s163 = sand.u32 %s72, 1
        %s164 = smul.addr %s163, 8
        %s165 = scalar_lea.vmem [#allocation4], %s164
        // Predicated region
        $region33: #{tpu_custom_call.1} parent=31 // pred_check
          %p166 = pneg %p85
        $region34: #{tpu_custom_call.1} parent=31 // pred_check_branch
          %168 = sbr.rel (%p166) target = $region36
        $region35: #{tpu_custom_call.1} parent=31 // pred_region
          %169 = dma.done %s162, 128
        $region36: #{tpu_custom_call.1} parent=31 // pred_fallthru
          _
        %p170 = pneg %p38
        %p171 = pneg %p35
        %p172 = pneg %p59
        %p173 = pneg %p56
        %s174 = sand.u32 %s72, 1
        %s175 = scalar_lea.sflag [#allocation5], %s174
        %s176 = sand.u32 %s72, 1
        %s177 = smul.addr %s176, 8
        %s178 = scalar_lea.vmem [#allocation4], %s177
        %p179 = pneg %p85
        %p180 = pneg %p82
        %p181 = pneg %p111
        %p182 = pneg %p108
        %s183 = sand.u32 %s98, 1
        %s184 = scalar_lea.sflag [#allocation6], %s183
        %s185 = sand.u32 %s98, 1
        %s186 = smul.addr %s185, 8
        %s187 = scalar_lea.vmem [#allocation7], %s186
        %v188 = vld [vmem:[%s165] sm:$0xff]
        %189 = vadd.xlane.f32.xlu0 %v188
        %v190 = vpop.xlane.xlu0 %189
        %v191 = vrcp.pop 128.0
        %v192 = vmul.f32 %v190, %v191
        %v193 = vsub.f32 %v188, %v192
        %v194 = vmul.f32 %v193, %v193
        %195 = vadd.xlane.f32.xlu0 %v194
        %v196 = vpop.xlane.xlu0 %195
        %v197 = vmul.f32 %v196, 0.007874016
        %v198 = vrsqrt.pop %v197
        %v199 = vmul.f32 %v197, %v198
        %vm200 = vcmp.eq.f32.partialorder %v197, inf
        %v201 = vsel %vm200, %v197, %v199
        %vm202 = vcmp.eq.f32.partialorder %v197, 0.0
        %v203 = vand.u32 %v197, 2147483648
        %v204 = vsel %vm202, %v203, %v201
        %s205 = sld [smem:[#allocation2]]
        %v206 = vadd.f32 %v204, 1e-06
        %v207 = vstv %s205
        %v208 = vrcp.pop %v206
        %v209 = vmul.f32 %v207, %v208
        %v210 = vmul.f32 %v193, %v209
        %s211 = sld [smem:[#allocation3]]
        %v212 = vstv %s211
        %v213 = vadd.f32 %v210, %v212
        %214 = vst [vmem:[%s187] sm:$0xff] %v213
        %s215 = sand.u32 %s98, 1
        %s216 = scalar_lea.sflag [#allocation6], %s215
        %s217 = sand.u32 %s98, 1
        %s218 = smul.addr %s217, 8
        %s219 = scalar_lea.vmem [#allocation7], %s218
        // Predicated region
        $region37: #{tpu_custom_call.1} parent=31 // pred_check
          %p220 = pneg %p108
        $region38: #{tpu_custom_call.1} parent=31 // pred_check_branch
          %222 = sbr.rel (%p220) target = $region40
        $region39: #{tpu_custom_call.1} parent=31 // pred_region
          %s224 = ssub.s32 128, 128
          %225 = vsyncadd %s216, %s224
          %s226 = smul.addr %s22, 128
          %s227 = scalar_lea.hbm %s3, %s226
          %s229 = sshll.u32 %s219, 4
          %s230 = int_to_ptr.vmem [resolvable:$true] %s229
          %232 = dma.vmem_to_hbm [thread:$0]  %s230, 128, %s227, %s216
        $region40: #{tpu_custom_call.1} parent=31 // pred_fallthru
          _
      $region32: #{tpu_custom_call.1} parent=5 // pred_fallthru
        _
      %p233 = scmp.le.s32.totalorder 2, %s17
      // Predicated region
      $region41: #{tpu_custom_call.1} parent=5 // pred_check
        %p234 = pneg %p233
      $region42: #{tpu_custom_call.1} parent=5 // pred_check_branch
        %236 = sbr.rel (%p234) target = $region44
      $region43: #{tpu_custom_call.1} parent=5 // pred_region
        %s237 = ssub.s32 %s17, 2
        // Predicated region
        $region45: #{tpu_custom_call.1} parent=43 // pred_check
          %p238 = pneg %p114
        $region46: #{tpu_custom_call.1} parent=43 // pred_check_branch
          %240 = sbr.rel (%p238) target = $region48
        $region47: #{tpu_custom_call.1} parent=43 // pred_region
          %s241 = sand.u32 %s99, 1
          %s242 = scalar_lea.sflag [#allocation6], %s241
          %s243 = sand.u32 %s99, 1
          %s244 = smul.addr %s243, 8
          %s245 = scalar_lea.vmem [#allocation7], %s244
          %246 = dma.done %s242, 128
        $region48: #{tpu_custom_call.1} parent=43 // pred_fallthru
          _
      $region44: #{tpu_custom_call.1} parent=5 // pred_fallthru
        _
    $region6: #{tpu_custom_call.1} parent=1 // loop_footer
      %s21 = sadd.s32 1, %s17
    $region7: #{tpu_custom_call.1} parent=1 // loop_footer_branch
      %16 = sbr.rel target = $region3
    $region8: #{tpu_custom_call.1} parent=1 // loop_exit
      _
    %247 = vsyncpa [#allocation5], 1
    %s248 = scalar_lea.sflag [#allocation5], 1
    %249 = vsyncpa %s248, 1
    %250 = vsyncpa [#allocation6], 1
    %s251 = scalar_lea.sflag [#allocation6], 1
    %252 = vsyncpa %s251, 1

</llo_original>
